<compile_context>
chip_gen: v7x
topology: tpu7x:2x2x1
jax: 0.10.0
libtpu: 0.0.40
codegen_flags: <defaults>
</compile_context>

<pallas_src>
import jax
import jax.numpy as jnp
from jax.experimental import pallas as pl
from jax.experimental.pallas import tpu as pltpu


def _round_up(x, m):
    return ((x + m - 1) // m) * m


def _pick_col_tile(out_dim_padded):
    """Column tile for fc4/output; out_dim_padded is a multiple of 128."""
    for tc in (2048, 1024, 512, 256, 128):
        if out_dim_padded % tc == 0:
            return tc
    return out_dim_padded


def _vmem_cap_bytes():
    """Conservative scoped-VMEM ceiling: physical minus headroom, <=100 MiB."""
    phys = 64 << 20
    try:
        info = pltpu.get_tpu_info()
        phys = int(getattr(info, "vmem_capacity_bytes", phys))
    except Exception:
        pass
    return max(min(phys - (16 << 20), 100 << 20), 16 << 20)


def _spec(block_shape, index_map, buffers=None):
    """BlockSpec with optional explicit pipeline buffer count."""
    if buffers is not None and hasattr(pl, "Buffered"):
        try:
            return pl.BlockSpec(block_shape, index_map,
                                pipeline_mode=pl.Buffered(buffers))
        except TypeError:
            pass
    return pl.BlockSpec(block_shape, index_map)


def decoder_kernel(x_ref,
                   w1_ref, s1_ref, t1_ref,
                   w2_ref, s2_ref, t2_ref,
                   w3_ref, s3_ref, t3_ref,
                   w4_ref, b4_ref,
                   out_ref,
                   h3_ref):
    # Stages 1-3 run once per batch tile.  h3_ref caching is only valid while
    # the column grid axis is "arbitrary" (sequential; j==0 first per batch tile).
    @pl.when(pl.program_id(1) == 0)
    def _():
        # Stage 1: relu(bn1(fc1(x)))   (BN + bias folded into s1/t1)
        h = jnp.dot(x_ref[...], w1_ref[...], preferred_element_type=jnp.float32)
        h = jnp.maximum(h * s1_ref[...] + t1_ref[...], 0.0).astype(jnp.bfloat16)
        # Stage 2: relu(bn2(fc2(h)))
        h = jnp.dot(h, w2_ref[...], preferred_element_type=jnp.float32)
        h = jnp.maximum(h * s2_ref[...] + t2_ref[...], 0.0).astype(jnp.bfloat16)
        # Stage 3: relu(bn3(fc3(h)))
        h = jnp.dot(h, w3_ref[...], preferred_element_type=jnp.float32)
        h = jnp.maximum(h * s3_ref[...] + t3_ref[...], 0.0).astype(jnp.bfloat16)
        h3_ref[...] = h

    # Stage 4 (per column tile): tanh(fc4(h3))
    h4 = jnp.dot(h3_ref[...], w4_ref[...], preferred_element_type=jnp.float32)
    # TODO(synk): on v6e/v7x a bf16 tanh would halve EUP time; kept f32 because
    # v5e's EUP has no bf16 path.
    out_ref[...] = jnp.tanh(h4 + b4_ref[...]).astype(out_ref.dtype)


def decoder_forward(x, params, num_points,
                    out_dtype=jnp.bfloat16, transpose_output=True):
    """x: (B, bottleneck_size) float32 -> (B, num_points, 3) out_dtype."""
    B, C = x.shape
    (w1, s1, t1, w2, s2, t2, w3, s3, t3, w4, b4) = params
    d1, d2, d3 = w1.shape[1], w2.shape[1], w3.shape[1]
    out_dim = w4.shape[1]                    # = 3 * num_points

    # ---- batch tiling: multiple of 8 sublanes, <=128; ensure >=2 tiles when
    #      possible so v7x's second TensorCore is fed along the parallel axis.
    TB = min(128, _round_up(B, 8))
    Bp = _round_up(B, TB)
    if Bp // TB == 1 and B >= 16:
        TB = _round_up(TB // 2, 8)
        Bp = _round_up(B, TB)
    x = x.astype(jnp.bfloat16)
    if Bp != B:
        x = jnp.pad(x, ((0, Bp - B), (0, 0)))

    # ---- fc4 / output column tiling: pad ragged out_dim up to 128 so stores
    #      stay lane-dense (unmasked vst) and tiling is preserved.
    OD = _round_up(out_dim, 128)
    if OD != out_dim:
        w4 = jnp.pad(w4, ((0, 0), (0, OD - out_dim)))
        b4 = jnp.pad(b4, ((0, 0), (0, OD - out_dim)))
    TC = _pick_col_tile(OD)
    grid_rows, grid_cols = Bp // TB, OD // TC
    grid = (grid_rows, grid_cols)
    w4_buffers = 1 if grid_cols == 1 else min(3, grid_cols)

    # ---- scoped VMEM estimate (single-buffered residents, buffered w4 tiles,
    #      double-buffered x / out, h3 scratch, live-intermediate headroom).
    out_bytes = jnp.dtype(out_dtype).itemsize
    bytes_resident = 2 * (w1.size + w2.size + w3.size) \
        + 4 * 8 * (2 * d1 + 2 * d2 + 2 * d3)            # (1,d) pads to 8 sublanes
    bytes_w4 = w4_buffers * (d3 * TC * 2 + 8 * TC * 4)
    bytes_io = 2 * TB * C * 2 + 2 * TB * TC * out_bytes
    bytes_scratch = TB * d3 * 2
    bytes_act = 3 * TB * max(d1, d2, d3, TC) * 4
    est = bytes_resident + bytes_w4 + bytes_io + bytes_scratch + bytes_act
    vmem_limit = int(min(max(2 * est, 16 << 20), _vmem_cap_bytes()))

    const2d = lambda i, j: (0, 0)
    in_specs = [
        _spec((TB, C), lambda i, j: (i, 0)),                   # x (pipelined)
        _spec((C, d1), const2d, buffers=1),                    # w1  (resident)
        _spec((1, d1), const2d, buffers=1),                    # s1
        _spec((1, d1), const2d, buffers=1),                    # t1
        _spec((d1, d2), const2d, buffers=1),                   # w2
        _spec((1, d2), const2d, buffers=1),                    # s2
        _spec((1, d2), const2d, buffers=1),                    # t2
        _spec((d2, d3), const2d, buffers=1),                   # w3
        _spec((1, d3), const2d, buffers=1),                    # s3
        _spec((1, d3), const2d, buffers=1),                    # t3
        _spec((d3, TC), lambda i, j: (0, j), buffers=w4_buffers),  # w4 (col-tiled)
        _spec((1, TC), lambda i, j: (0, j), buffers=w4_buffers),   # b4 (col-tiled)
    ]
    out_spec = pl.BlockSpec((TB, TC), lambda i, j: (i, j))

    flat = pl.pallas_call(
        decoder_kernel,
        out_shape=jax.ShapeDtypeStruct((Bp, OD), out_dtype),
        grid=grid,
        in_specs=in_specs,
        out_specs=out_spec,
        scratch_shapes=[pltpu.VMEM((TB, d3), jnp.bfloat16)],   # h3 cache
        compiler_params=pltpu.CompilerParams(
            dimension_semantics=("parallel", "arbitrary"),
            vmem_limit_bytes=vmem_limit),
    )(x, w1, s1, t1, w2, s2, t2, w3, s3, t3, w4, b4)

    flat = flat[:B, :out_dim]
    if transpose_output:
        # torch: .view(B, 3, N).transpose(1, 2) -> (B, N, 3)
        return jnp.transpose(flat.reshape(B, 3, num_points), (0, 2, 1))
    # TODO(synk): consumers that accept the (B, 3, N) layout should pass
    # transpose_output=False to skip re-reading/re-writing the whole output in HBM.
    return flat.reshape(B, 3, num_points)


def decoder_reference(x, params, num_points):
    """Pure-JAX f32 reference (same folded-BN params, weights upcast from bf16)."""
    (w1, s1, t1, w2, s2, t2, w3, s3, t3, w4, b4) = params
    B = x.shape[0]
    h = jnp.maximum(jnp.dot(x, w1.astype(jnp.float32)) * s1 + t1, 0.0)
    h = jnp.maximum(jnp.dot(h, w2.astype(jnp.float32)) * s2 + t2, 0.0)
    h = jnp.maximum(jnp.dot(h, w3.astype(jnp.float32)) * s3 + t3, 0.0)
    h = jnp.tanh(jnp.dot(h, w4.astype(jnp.float32)) + b4)
    return jnp.transpose(h.reshape(B, 3, num_points), (0, 2, 1))


def make_params(key, bottleneck_size, num_points):
    """Deterministic synthetic parameters (torch-shape-compatible), with
    BatchNorm (eval mode) + linear bias folded into per-feature scale/shift.
    Weights are stored transposed (in, out) in bf16; affines stay f32."""
    dims = [bottleneck_size, bottleneck_size, bottleneck_size // 2,
            bottleneck_size // 4, num_points * 3]
    eps = 1e-5
    keys = jax.random.split(key, 20)
    ki = iter(keys)

    params = []
    for layer in range(4):
        d_in, d_out = dims[layer], dims[layer + 1]
        # torch Linear: weight (out, in), bias (out,). Store transposed (in, out).
        w = jax.random.normal(next(ki), (d_in, d_out), jnp.float32) * 0.05
        b = jax.random.normal(next(ki), (d_out,), jnp.float32) * 0.05
        if layer < 3:
            # BatchNorm1d(d_out) in eval mode, folded:
            gamma = 1.0 + 0.1 * jax.random.normal(next(ki), (d_out,), jnp.float32)
            beta = 0.1 * jax.random.normal(next(ki), (d_out,), jnp.float32)
            run_mean = 0.1 * jax.random.normal(next(ki), (d_out,), jnp.float32)
            run_var = jnp.abs(jax.random.normal(next(ki), (d_out,), jnp.float32)) + 0.5
            scale = gamma / jnp.sqrt(run_var + eps)          # per-feature multiplier
            shift = beta - run_mean * scale + b * scale      # fold linear bias too
            params += [w.astype(jnp.bfloat16),
                       scale.reshape(1, d_out),
                       shift.reshape(1, d_out)]
        else:
            params += [w.astype(jnp.bfloat16), b.reshape(1, d_out)]
    return tuple(params)


if __name__ == "__main__":
    # Small shapes consistent with the module (fc: 64 -> 64 -> 32 -> 16 -> 3*N).
    batch = 2
    bottleneck_size = 64
    num_points = 16

    key = jax.random.PRNGKey(0)
    kx, kp = jax.random.split(key)
    x = jax.random.normal(kx, (batch, bottleneck_size), jnp.float32)
    params = make_params(kp, bottleneck_size, num_points)

    out = decoder_forward(x, params, num_points)
    out = jax.block_until_ready(out)
    assert out.shape == (batch, num_points, 3), out.shape

    out_f32 = out.astype(jnp.float32)
    assert bool(jnp.all(jnp.isfinite(out_f32)))

    # Validate against f32 reference (bf16 matmul inputs, f32 accumulation, bf16 out).
    ref = decoder_reference(x, params, num_points)
    max_err = float(jnp.max(jnp.abs(out_f32 - ref)))
    assert max_err < 5e-2, f"max abs error {max_err}"

    print("KERNEL_OK")
</pallas_src>

<mosaic_0001>
module attributes {stable_mosaic.version = 11 : i64} {
  func.func @decoder_kernel(%arg0: i32, %arg1: i32, %arg2: memref<8x64xbf16, #tpu.memory_space<vmem>>, %arg3: memref<64x64xbf16, #tpu.memory_space<vmem>>, %arg4: memref<1x64xf32, #tpu.memory_space<vmem>>, %arg5: memref<1x64xf32, #tpu.memory_space<vmem>>, %arg6: memref<64x32xbf16, #tpu.memory_space<vmem>>, %arg7: memref<1x32xf32, #tpu.memory_space<vmem>>, %arg8: memref<1x32xf32, #tpu.memory_space<vmem>>, %arg9: memref<32x16xbf16, #tpu.memory_space<vmem>>, %arg10: memref<1x16xf32, #tpu.memory_space<vmem>>, %arg11: memref<1x16xf32, #tpu.memory_space<vmem>>, %arg12: memref<16x128xbf16, #tpu.memory_space<vmem>>, %arg13: memref<1x128xf32, #tpu.memory_space<vmem>>, %arg14: memref<8x128xbf16, #tpu.memory_space<vmem>>, %arg15: memref<8x16xbf16, #tpu.memory_space<vmem>>) attributes {dimension_semantics = [#tpu.dimension_semantics<parallel>, #tpu.dimension_semantics<arbitrary>], iteration_bounds = array<i64: 1, 1>, scalar_prefetch = 0 : i64, scratch_operands = 1 : i64, tpu.core_type = #tpu.core_type<tc>, window_params = [{transform_indices = @transform_0, window_bounds = array<i64: 8, 64>}, {pipeline_mode = #tpu.pipeline_mode<synchronous>, transform_indices = @transform_1, window_bounds = array<i64: 64, 64>}, {pipeline_mode = #tpu.pipeline_mode<synchronous>, transform_indices = @transform_2, window_bounds = array<i64: 1, 64>}, {pipeline_mode = #tpu.pipeline_mode<synchronous>, transform_indices = @transform_3, window_bounds = array<i64: 1, 64>}, {pipeline_mode = #tpu.pipeline_mode<synchronous>, transform_indices = @transform_4, window_bounds = array<i64: 64, 32>}, {pipeline_mode = #tpu.pipeline_mode<synchronous>, transform_indices = @transform_5, window_bounds = array<i64: 1, 32>}, {pipeline_mode = #tpu.pipeline_mode<synchronous>, transform_indices = @transform_6, window_bounds = array<i64: 1, 32>}, {pipeline_mode = #tpu.pipeline_mode<synchronous>, transform_indices = @transform_7, window_bounds = array<i64: 32, 16>}, {pipeline_mode = #tpu.pipeline_mode<synchronous>, transform_indices = @transform_8, window_bounds = array<i64: 1, 16>}, {pipeline_mode = #tpu.pipeline_mode<synchronous>, transform_indices = @transform_9, window_bounds = array<i64: 1, 16>}, {pipeline_mode = #tpu.pipeline_mode<synchronous>, transform_indices = @transform_10, window_bounds = array<i64: 16, 128>}, {pipeline_mode = #tpu.pipeline_mode<synchronous>, transform_indices = @transform_11, window_bounds = array<i64: 1, 128>}, {transform_indices = @transform_12, window_bounds = array<i64: 8, 128>}]} {
    %c0_i32 = arith.constant 0 : i32
    %0 = arith.cmpi eq, %arg1, %c0_i32 : i32
    %1 = arith.extui %0 : i1 to i32
    %c0_i32_0 = arith.constant 0 : i32
    %2 = arith.cmpi ne, %1, %c0_i32_0 : i32
    scf.if %2 {
      %c0_8 = arith.constant 0 : index
      %c0_9 = arith.constant 0 : index
      %12 = vector.load %arg2[%c0_8, %c0_9] : memref<8x64xbf16, #tpu.memory_space<vmem>>, vector<8x64xbf16>
      %c0_10 = arith.constant 0 : index
      %c0_11 = arith.constant 0 : index
      %13 = vector.load %arg3[%c0_10, %c0_11] : memref<64x64xbf16, #tpu.memory_space<vmem>>, vector<64x64xbf16>
      %cst_12 = arith.constant dense<0.000000e+00> : vector<8x64xf32>
      %14 = tpu.matmul %12, %13, %cst_12 {dimension_numbers = #tpu.dot_dimension_numbers<[1], [0], [0], [1], [0, 0, 1, 1], [], []>} : vector<8x64xbf16>, vector<64x64xbf16>, vector<8x64xf32> -> vector<8x64xf32>
      %c0_13 = arith.constant 0 : index
      %c0_14 = arith.constant 0 : index
      %15 = vector.load %arg4[%c0_13, %c0_14] : memref<1x64xf32, #tpu.memory_space<vmem>>, vector<1x64xf32>
      %16 = vector.broadcast %15 : vector<1x64xf32> to vector<8x64xf32>
      %17 = arith.mulf %14, %16 : vector<8x64xf32>
      %c0_15 = arith.constant 0 : index
      %c0_16 = arith.constant 0 : index
      %18 = vector.load %arg5[%c0_15, %c0_16] : memref<1x64xf32, #tpu.memory_space<vmem>>, vector<1x64xf32>
      %19 = vector.broadcast %18 : vector<1x64xf32> to vector<8x64xf32>
      %20 = arith.addf %17, %19 : vector<8x64xf32>
      %cst_17 = arith.constant 0.000000e+00 : f32
      %21 = vector.broadcast %cst_17 : f32 to vector<8x64xf32>
      %22 = arith.maximumf %20, %21 : vector<8x64xf32>
      %23 = arith.truncf %22 : vector<8x64xf32> to vector<8x64xbf16>
      %c0_18 = arith.constant 0 : index
      %c0_19 = arith.constant 0 : index
      %24 = vector.load %arg6[%c0_18, %c0_19] : memref<64x32xbf16, #tpu.memory_space<vmem>>, vector<64x32xbf16>
      %cst_20 = arith.constant dense<0.000000e+00> : vector<8x32xf32>
      %25 = tpu.matmul %23, %24, %cst_20 {dimension_numbers = #tpu.dot_dimension_numbers<[1], [0], [0], [1], [0, 0, 1, 1], [], []>} : vector<8x64xbf16>, vector<64x32xbf16>, vector<8x32xf32> -> vector<8x32xf32>
      %c0_21 = arith.constant 0 : index
      %c0_22 = arith.constant 0 : index
      %26 = vector.load %arg7[%c0_21, %c0_22] : memref<1x32xf32, #tpu.memory_space<vmem>>, vector<1x32xf32>
      %27 = vector.broadcast %26 : vector<1x32xf32> to vector<8x32xf32>
      %28 = arith.mulf %25, %27 : vector<8x32xf32>
      %c0_23 = arith.constant 0 : index
      %c0_24 = arith.constant 0 : index
      %29 = vector.load %arg8[%c0_23, %c0_24] : memref<1x32xf32, #tpu.memory_space<vmem>>, vector<1x32xf32>
      %30 = vector.broadcast %29 : vector<1x32xf32> to vector<8x32xf32>
      %31 = arith.addf %28, %30 : vector<8x32xf32>
      %cst_25 = arith.constant 0.000000e+00 : f32
      %32 = vector.broadcast %cst_25 : f32 to vector<8x32xf32>
      %33 = arith.maximumf %31, %32 : vector<8x32xf32>
      %34 = arith.truncf %33 : vector<8x32xf32> to vector<8x32xbf16>
      %c0_26 = arith.constant 0 : index
      %c0_27 = arith.constant 0 : index
      %35 = vector.load %arg9[%c0_26, %c0_27] : memref<32x16xbf16, #tpu.memory_space<vmem>>, vector<32x16xbf16>
      %cst_28 = arith.constant dense<0.000000e+00> : vector<8x16xf32>
      %36 = tpu.matmul %34, %35, %cst_28 {dimension_numbers = #tpu.dot_dimension_numbers<[1], [0], [0], [1], [0, 0, 1, 1], [], []>} : vector<8x32xbf16>, vector<32x16xbf16>, vector<8x16xf32> -> vector<8x16xf32>
      %c0_29 = arith.constant 0 : index
      %c0_30 = arith.constant 0 : index
      %37 = vector.load %arg10[%c0_29, %c0_30] : memref<1x16xf32, #tpu.memory_space<vmem>>, vector<1x16xf32>
      %38 = vector.broadcast %37 : vector<1x16xf32> to vector<8x16xf32>
      %39 = arith.mulf %36, %38 : vector<8x16xf32>
      %c0_31 = arith.constant 0 : index
      %c0_32 = arith.constant 0 : index
      %40 = vector.load %arg11[%c0_31, %c0_32] : memref<1x16xf32, #tpu.memory_space<vmem>>, vector<1x16xf32>
      %41 = vector.broadcast %40 : vector<1x16xf32> to vector<8x16xf32>
      %42 = arith.addf %39, %41 : vector<8x16xf32>
      %cst_33 = arith.constant 0.000000e+00 : f32
      %43 = vector.broadcast %cst_33 : f32 to vector<8x16xf32>
      %44 = arith.maximumf %42, %43 : vector<8x16xf32>
      %45 = arith.truncf %44 : vector<8x16xf32> to vector<8x16xbf16>
      %c0_34 = arith.constant 0 : index
      %c0_35 = arith.constant 0 : index
      %46 = vector.load %arg15[%c0_34, %c0_35] : memref<8x16xbf16, #tpu.memory_space<vmem>>, vector<8x16xbf16>
      tpu.vector_store %arg15[%c0_34, %c0_35], %45 {strides = array<i32>} : memref<8x16xbf16, #tpu.memory_space<vmem>>, vector<8x16xbf16>,
    } else {
    }
    %c0 = arith.constant 0 : index
    %c0_1 = arith.constant 0 : index
    %3 = vector.load %arg15[%c0, %c0_1] : memref<8x16xbf16, #tpu.memory_space<vmem>>, vector<8x16xbf16>
    %c0_2 = arith.constant 0 : index
    %c0_3 = arith.constant 0 : index
    %4 = vector.load %arg12[%c0_2, %c0_3] : memref<16x128xbf16, #tpu.memory_space<vmem>>, vector<16x128xbf16>
    %cst = arith.constant dense<0.000000e+00> : vector<8x128xf32>
    %5 = tpu.matmul %3, %4, %cst {dimension_numbers = #tpu.dot_dimension_numbers<[1], [0], [0], [1], [0, 0, 1, 1], [], []>} : vector<8x16xbf16>, vector<16x128xbf16>, vector<8x128xf32> -> vector<8x128xf32>
    %c0_4 = arith.constant 0 : index
    %c0_5 = arith.constant 0 : index
    %6 = vector.load %arg13[%c0_4, %c0_5] : memref<1x128xf32, #tpu.memory_space<vmem>>, vector<1x128xf32>
    %7 = vector.broadcast %6 : vector<1x128xf32> to vector<8x128xf32>
    %8 = arith.addf %5, %7 : vector<8x128xf32>
    %9 = math.tanh %8 : vector<8x128xf32>
    %10 = arith.truncf %9 : vector<8x128xf32> to vector<8x128xbf16>
    %c0_6 = arith.constant 0 : index
    %c0_7 = arith.constant 0 : index
    %11 = vector.load %arg14[%c0_6, %c0_7] : memref<8x128xbf16, #tpu.memory_space<vmem>>, vector<8x128xbf16>
    tpu.vector_store %arg14[%c0_6, %c0_7], %10 {strides = array<i32>} : memref<8x128xbf16, #tpu.memory_space<vmem>>, vector<8x128xbf16>,
    return
  }
  func.func @transform_0(%arg0: i32, %arg1: i32) -> (i32, i32) {
    %c0_i32 = arith.constant 0 : i32
    %c0_i32_0 = arith.constant 0 : i32
    return %arg0, %c0_i32 : i32, i32
  }
  func.func @transform_1(%arg0: i32, %arg1: i32) -> (i32, i32) {
    %c0_i32 = arith.constant 0 : i32
    %c0_i32_0 = arith.constant 0 : i32
    %c0_i32_1 = arith.constant 0 : i32
    return %c0_i32, %c0_i32_0 : i32, i32
  }
  func.func @transform_2(%arg0: i32, %arg1: i32) -> (i32, i32) {
    %c0_i32 = arith.constant 0 : i32
    %c0_i32_0 = arith.constant 0 : i32
    %c0_i32_1 = arith.constant 0 : i32
    return %c0_i32, %c0_i32_0 : i32, i32
  }
  func.func @transform_3(%arg0: i32, %arg1: i32) -> (i32, i32) {
    %c0_i32 = arith.constant 0 : i32
    %c0_i32_0 = arith.constant 0 : i32
    %c0_i32_1 = arith.constant 0 : i32
    return %c0_i32, %c0_i32_0 : i32, i32
  }
  func.func @transform_4(%arg0: i32, %arg1: i32) -> (i32, i32) {
    %c0_i32 = arith.constant 0 : i32
    %c0_i32_0 = arith.constant 0 : i32
    %c0_i32_1 = arith.constant 0 : i32
    return %c0_i32, %c0_i32_0 : i32, i32
  }
  func.func @transform_5(%arg0: i32, %arg1: i32) -> (i32, i32) {
    %c0_i32 = arith.constant 0 : i32
    %c0_i32_0 = arith.constant 0 : i32
    %c0_i32_1 = arith.constant 0 : i32
    return %c0_i32, %c0_i32_0 : i32, i32
  }
  func.func @transform_6(%arg0: i32, %arg1: i32) -> (i32, i32) {
    %c0_i32 = arith.constant 0 : i32
    %c0_i32_0 = arith.constant 0 : i32
    %c0_i32_1 = arith.constant 0 : i32
    return %c0_i32, %c0_i32_0 : i32, i32
  }
  func.func @transform_7(%arg0: i32, %arg1: i32) -> (i32, i32) {
    %c0_i32 = arith.constant 0 : i32
    %c0_i32_0 = arith.constant 0 : i32
    %c0_i32_1 = arith.constant 0 : i32
    return %c0_i32, %c0_i32_0 : i32, i32
  }
  func.func @transform_8(%arg0: i32, %arg1: i32) -> (i32, i32) {
    %c0_i32 = arith.constant 0 : i32
    %c0_i32_0 = arith.constant 0 : i32
    %c0_i32_1 = arith.constant 0 : i32
    return %c0_i32, %c0_i32_0 : i32, i32
  }
  func.func @transform_9(%arg0: i32, %arg1: i32) -> (i32, i32) {
    %c0_i32 = arith.constant 0 : i32
    %c0_i32_0 = arith.constant 0 : i32
    %c0_i32_1 = arith.constant 0 : i32
    return %c0_i32, %c0_i32_0 : i32, i32
  }
  func.func @transform_10(%arg0: i32, %arg1: i32) -> (i32, i32) {
    %c0_i32 = arith.constant 0 : i32
    %c0_i32_0 = arith.constant 0 : i32
    return %c0_i32, %arg1 : i32, i32
  }
  func.func @transform_11(%arg0: i32, %arg1: i32) -> (i32, i32) {
    %c0_i32 = arith.constant 0 : i32
    %c0_i32_0 = arith.constant 0 : i32
    return %c0_i32, %arg1 : i32, i32
  }
  func.func @transform_12(%arg0: i32, %arg1: i32) -> (i32, i32) {
    %c0_i32 = arith.constant 0 : i32
    return %arg0, %arg1 : i32, i32
  }
}

</mosaic_0001>

<llo_original>
// kernel: tpu_custom_call.1
$region0: #{tpu_custom_call.1}
  #allocation0 [shape = 'u32[]', space=smem, size = 0x4, offset = 0x4, fixed_abs, tag = 'smem constant byte address 0x4 - core index']
  #allocation1 [shape = 'u32[144,128]{1,0:T(1,128)}', space=vmem, size = 0x12000, scoped, tag = 'internal scratch']
  #allocation2 [shape = 'bf16[8,16]{1,0:T(8,128)(2,1)}', space=vmem, size = 0x800, scoped, tag = 'scratch operand']
  %s0 = inlined_call_operand.vmem [shape: bf16[8,64], index: 0, kind: input, shape index: {}]
  %s1 = inlined_call_operand.vmem [shape: bf16[64,64], index: 1, kind: input, shape index: {}]
  %s2 = inlined_call_operand.vmem [shape: f32[1,64], index: 2, kind: input, shape index: {}]
  %s3 = inlined_call_operand.vmem [shape: f32[1,64], index: 3, kind: input, shape index: {}]
  %s4 = inlined_call_operand.vmem [shape: bf16[64,32], index: 4, kind: input, shape index: {}]
  %s5 = inlined_call_operand.vmem [shape: f32[1,32], index: 5, kind: input, shape index: {}]
  %s6 = inlined_call_operand.vmem [shape: f32[1,32], index: 6, kind: input, shape index: {}]
  %s7 = inlined_call_operand.vmem [shape: bf16[32,16], index: 7, kind: input, shape index: {}]
  %s8 = inlined_call_operand.vmem [shape: f32[1,16], index: 8, kind: input, shape index: {}]
  %s9 = inlined_call_operand.vmem [shape: f32[1,16], index: 9, kind: input, shape index: {}]
  %s10 = inlined_call_operand.vmem [shape: bf16[16,128], index: 10, kind: input, shape index: {}]
  %s11 = inlined_call_operand.vmem [shape: f32[1,128], index: 11, kind: input, shape index: {}]
  %s12 = inlined_call_operand.hbm [shape: bf16[8,128], index: 12, kind: output, shape index: {}]
  %s13 = sld [smem:[#allocation0]]
  $region62: #{tpu_custom_call.1} parent=0
    _
  %s15 = ssub.s32 1, %s13
  %s16 = scalar_select 0, %s15, %s13
  $region1: #{tpu_custom_call.1} parent=0
    #allocation3 [shape = 'u8[2048]{0}', space=vmem, size = 0x800, scoped, tag = 'output window, operand 0, single buffered']
    #allocation4 [shape = 's32[1]{0}', space=sflag, size = 0x4, scoped, tag = 'scoped memory for tpu_custom_call.1']
    %17 = vsyncpa [#allocation4], 0
    // Predicated region
    $region2: #{tpu_custom_call.1} parent=1 // pred_check
      _
    $region3: #{tpu_custom_call.1} parent=1 // pred_check_branch
      %19 = sbr.rel (0) target = $region5
    $region4: #{tpu_custom_call.1} parent=1 // pred_region
      _
    $region5: #{tpu_custom_call.1} parent=1 // pred_fallthru
      _
    // Predicated region
    $region6: #{tpu_custom_call.1} parent=1 // pred_check
      _
    $region7: #{tpu_custom_call.1} parent=1 // pred_check_branch
      %21 = sbr.rel (0) target = $region9
    $region8: #{tpu_custom_call.1} parent=1 // pred_region
      _
    $region9: #{tpu_custom_call.1} parent=1 // pred_fallthru
      _
    // Predicated region
    $region10: #{tpu_custom_call.1} parent=1 // pred_check
      _
    $region11: #{tpu_custom_call.1} parent=1 // pred_check_branch
      %23 = sbr.rel (0) target = $region13
    $region12: #{tpu_custom_call.1} parent=1 // pred_region
      _
    $region13: #{tpu_custom_call.1} parent=1 // pred_fallthru
      _
    // Predicated region
    $region14: #{tpu_custom_call.1} parent=1 // pred_check
      _
    $region15: #{tpu_custom_call.1} parent=1 // pred_check_branch
      %25 = sbr.rel (0) target = $region17
    $region16: #{tpu_custom_call.1} parent=1 // pred_region
      _
    $region17: #{tpu_custom_call.1} parent=1 // pred_fallthru
      _
    // Predicated region
    $region18: #{tpu_custom_call.1} parent=1 // pred_check
      _
    $region19: #{tpu_custom_call.1} parent=1 // pred_check_branch
      %27 = sbr.rel (0) target = $region21
    $region20: #{tpu_custom_call.1} parent=1 // pred_region
      _
    $region21: #{tpu_custom_call.1} parent=1 // pred_fallthru
      _
    // Predicated region
    $region22: #{tpu_custom_call.1} parent=1 // pred_check
      _
    $region23: #{tpu_custom_call.1} parent=1 // pred_check_branch
      %29 = sbr.rel (0) target = $region25
    $region24: #{tpu_custom_call.1} parent=1 // pred_region
      _
    $region25: #{tpu_custom_call.1} parent=1 // pred_fallthru
      _
    // Predicated region
    $region26: #{tpu_custom_call.1} parent=1 // pred_check
      _
    $region27: #{tpu_custom_call.1} parent=1 // pred_check_branch
      %31 = sbr.rel (0) target = $region29
    $region28: #{tpu_custom_call.1} parent=1 // pred_region
      _
    $region29: #{tpu_custom_call.1} parent=1 // pred_fallthru
      _
    // Predicated region
    $region30: #{tpu_custom_call.1} parent=1 // pred_check
      _
    $region31: #{tpu_custom_call.1} parent=1 // pred_check_branch
      %33 = sbr.rel (0) target = $region33
    $region32: #{tpu_custom_call.1} parent=1 // pred_region
      _
    $region33: #{tpu_custom_call.1} parent=1 // pred_fallthru
      _
    // Predicated region
    $region34: #{tpu_custom_call.1} parent=1 // pred_check
      _
    $region35: #{tpu_custom_call.1} parent=1 // pred_check_branch
      %35 = sbr.rel (0) target = $region37
    $region36: #{tpu_custom_call.1} parent=1 // pred_region
      _
    $region37: #{tpu_custom_call.1} parent=1 // pred_fallthru
      _
    // Predicated region
    $region38: #{tpu_custom_call.1} parent=1 // pred_check
      _
    $region39: #{tpu_custom_call.1} parent=1 // pred_check_branch
      %37 = sbr.rel (0) target = $region41
    $region40: #{tpu_custom_call.1} parent=1 // pred_region
      _
    $region41: #{tpu_custom_call.1} parent=1 // pred_fallthru
      _
    // Predicated region
    $region42: #{tpu_custom_call.1} parent=1 // pred_check
      _
    $region43: #{tpu_custom_call.1} parent=1 // pred_check_branch
      %39 = sbr.rel (0) target = $region45
    $region44: #{tpu_custom_call.1} parent=1 // pred_region
      _
    $region45: #{tpu_custom_call.1} parent=1 // pred_fallthru
      _
    // Predicated region
    $region46: #{tpu_custom_call.1} parent=1 // pred_check
      _
    $region47: #{tpu_custom_call.1} parent=1 // pred_check_branch
      %41 = sbr.rel (0) target = $region49
    $region48: #{tpu_custom_call.1} parent=1 // pred_region
      _
    $region49: #{tpu_custom_call.1} parent=1 // pred_fallthru
      _
    %p43 = scmp.eq.s32.totalorder 0, 0
    // Predicated region
    $region50: #{tpu_custom_call.1} parent=1 // pred_check
      %p44 = pneg %p43
    $region51: #{tpu_custom_call.1} parent=1 // pred_check_branch
      %46 = sbr.rel (%p44) target = $region53
    $region52: #{tpu_custom_call.1} parent=1 // pred_region
      %v47 = vld [vmem:[%s0] sm:$0xf]
      %v48 = vld [vmem:[%s1] sm:$0xf]
      %v49 = vld [vmem:[%s1 + $0x4] sm:$0xf]
      %v50 = vld [vmem:[%s1 + $0x8] sm:$0xf]
      %v51 = vld [vmem:[%s1 + $0xc] sm:$0xf]
      %v52 = vld [vmem:[%s1 + $0x10] sm:$0xf]
      %v53 = vld [vmem:[%s1 + $0x14] sm:$0xf]
      %v54 = vld [vmem:[%s1 + $0x18] sm:$0xf]
      %v55 = vld [vmem:[%s1 + $0x1c] sm:$0xf]
      %v64 = vunpack.c.l.b16 %v48
      %v65 = vunpack.c.l.b16 %v49
      %v66 = vunpack.c.l.b16 %v50
      %v67 = vunpack.c.l.b16 %v51
      %v68 = vunpack.c.l.b16 %v52
      %v69 = vunpack.c.l.b16 %v53
      %v70 = vunpack.c.l.b16 %v54
      %v71 = vunpack.c.l.b16 %v55
      %v72 = vpack.c.b16 %v65, %v64
      %v73 = vpack.c.b16 %v67, %v66
      %v74 = vpack.c.b16 %v69, %v68
      %v75 = vpack.c.b16 %v71, %v70
      %vm80 = vcmask 523264
      %v82 = vsel %vm80, %v47, 0
      %84 = vmatprep.subr.bf16.mxu0 0
      %85 = vmatpush1.bf16.msra.mxu0 %v72
      %86 = vmatprep.subr.bf16.mxu0 0
      %87 = vmatpush1.bf16.msra.mxu0 %v73
      %88 = vmatprep.subr.bf16.mxu0 0
      %89 = vmatpush1.bf16.msra.mxu0 %v74
      %90 = vmatprep.subr.bf16.mxu0 0
      %91 = vmatpush1.bf16.msra.mxu0 %v75
      %92 = vmatprep.subr.bf16.mxu0 0
      %93 = vmatpush1.bf16.msra.mxu0 0
      %94 = vmatprep.subr.bf16.mxu0 0
      %95 = vmatpush1.bf16.msra.mxu0 0
      %96 = vmatprep.subr.bf16.mxu0 0
      %97 = vmatpush1.bf16.msra.mxu0 0
      %98 = vmatprep.subr.bf16.mxu0 0
      %99 = vmatpush1.bf16.msra.mxu0 0
      %100 = vmatprep.subr.bf16.mxu0 0
      %101 = vmatpush1.bf16.msra.mxu0 0
      %102 = vmatprep.subr.bf16.mxu0 0
      %103 = vmatpush1.bf16.msra.mxu0 0
      %104 = vmatprep.subr.bf16.mxu0 0
      %105 = vmatpush1.bf16.msra.mxu0 0
      %106 = vmatprep.subr.bf16.mxu0 0
      %107 = vmatpush1.bf16.msra.mxu0 0
      %108 = vmatprep.subr.bf16.mxu0 0
      %109 = vmatpush1.bf16.msra.mxu0 0
      %110 = vmatprep.subr.bf16.mxu0 0
      %111 = vmatpush1.bf16.msra.mxu0 0
      %112 = vmatprep.subr.bf16.mxu0 0
      %113 = vmatpush1.bf16.msra.mxu0 0
      %114 = vmatprep.subr.bf16.mxu0 0
      %115 = vmatpush1.bf16.msra.mxu0 0
      %116 = vmatprep.mubr.bf16.mxu0 0
      %117 = vmatmul.mubr.bf16.gmra.mrb[0].mxu0 %v82
      %v118 = vpop.f32.mrb[0].mxu0
      %v119 = vadd.f32 0.0, %v118
      %v120 = vpop.f32.mrb[0].mxu0
      %v121 = vpop.f32.mrb[0].mxu0
      %v122 = vpop.f32.mrb[0].mxu0
      %123 = vdwg.mxu0
      %v124 = vld [vmem:[%s2] sm:$0x1]
      %v126 = vlaneseq
      %v127 = vshrl.u32 %v126, 7
      %v128 = vsub.s32 0, %v127
      %v129 = vrot.slane %v124, %v128
      %v131 = vmul.f32 %v119, %v129
      %v132 = vld [vmem:[%s3] sm:$0x1]
      %v134 = vlaneseq
      %v135 = vshrl.u32 %v134, 7
      %v136 = vsub.s32 0, %v135
      %v137 = vrot.slane %v132, %v136
      %v139 = vadd.f32 %v131, %v137
      %v140 = vmax.f32 %v139, 0.0
      %v141 = vpack.c.bf16 %v140, %v140
      %v142 = vld [vmem:[%s4] sm:$0xf]
      %v143 = vld [vmem:[%s4 + $0x4] sm:$0xf]
      %v144 = vld [vmem:[%s4 + $0x8] sm:$0xf]
      %v145 = vld [vmem:[%s4 + $0xc] sm:$0xf]
      %v146 = vld [vmem:[%s4 + $0x10] sm:$0xf]
      %v147 = vld [vmem:[%s4 + $0x14] sm:$0xf]
      %v148 = vld [vmem:[%s4 + $0x18] sm:$0xf]
      %v149 = vld [vmem:[%s4 + $0x1c] sm:$0xf]
      %v158 = vunpack.c.l.b16 %v142
      %v159 = vunpack.c.l.b16 %v143
      %v160 = vunpack.c.l.b16 %v144
      %v161 = vunpack.c.l.b16 %v145
      %v162 = vunpack.c.l.b16 %v146
      %v163 = vunpack.c.l.b16 %v147
      %v164 = vunpack.c.l.b16 %v148
      %v165 = vunpack.c.l.b16 %v149
      %v166 = vpack.c.b16 %v159, %v158
      %v167 = vpack.c.b16 %v161, %v160
      %v168 = vpack.c.b16 %v163, %v162
      %v169 = vpack.c.b16 %v165, %v164
      %v175 = vsel %vm80, %v141, 0
      %177 = vmatprep.subr.bf16.mxu0 0
      %178 = vmatpush1.bf16.msra.mxu0 %v166
      %179 = vmatprep.subr.bf16.mxu0 0
      %180 = vmatpush1.bf16.msra.mxu0 %v167
      %181 = vmatprep.subr.bf16.mxu0 0
      %182 = vmatpush1.bf16.msra.mxu0 %v168
      %183 = vmatprep.subr.bf16.mxu0 0
      %184 = vmatpush1.bf16.msra.mxu0 %v169
      %185 = vmatprep.subr.bf16.mxu0 0
      %186 = vmatpush1.bf16.msra.mxu0 0
      %187 = vmatprep.subr.bf16.mxu0 0
      %188 = vmatpush1.bf16.msra.mxu0 0
      %189 = vmatprep.subr.bf16.mxu0 0
      %190 = vmatpush1.bf16.msra.mxu0 0
      %191 = vmatprep.subr.bf16.mxu0 0
      %192 = vmatpush1.bf16.msra.mxu0 0
      %193 = vmatprep.subr.bf16.mxu0 0
      %194 = vmatpush1.bf16.msra.mxu0 0
      %195 = vmatprep.subr.bf16.mxu0 0
      %196 = vmatpush1.bf16.msra.mxu0 0
      %197 = vmatprep.subr.bf16.mxu0 0
      %198 = vmatpush1.bf16.msra.mxu0 0
      %199 = vmatprep.subr.bf16.mxu0 0
      %200 = vmatpush1.bf16.msra.mxu0 0
      %201 = vmatprep.subr.bf16.mxu0 0
      %202 = vmatpush1.bf16.msra.mxu0 0
      %203 = vmatprep.subr.bf16.mxu0 0
      %204 = vmatpush1.bf16.msra.mxu0 0
      %205 = vmatprep.subr.bf16.mxu0 0
      %206 = vmatpush1.bf16.msra.mxu0 0
      %207 = vmatprep.subr.bf16.mxu0 0
      %208 = vmatpush1.bf16.msra.mxu0 0
      %209 = vmatprep.mubr.bf16.mxu0 0
      %210 = vmatmul.mubr.bf16.gmra.mrb[0].mxu0 %v175
      %v211 = vpop.f32.mrb[0].mxu0
      %v212 = vadd.f32 0.0, %v211
      %v213 = vpop.f32.mrb[0].mxu0
      %v214 = vpop.f32.mrb[0].mxu0
      %v215 = vpop.f32.mrb[0].mxu0
      %216 = vdwg.mxu0
      %v217 = vld [vmem:[%s5] sm:$0x1]
      %v219 = vlaneseq
      %v220 = vshrl.u32 %v219, 7
      %v221 = vsub.s32 0, %v220
      %v222 = vrot.slane %v217, %v221
      %v224 = vmul.f32 %v212, %v222
      %v225 = vld [vmem:[%s6] sm:$0x1]
      %v227 = vlaneseq
      %v228 = vshrl.u32 %v227, 7
      %v229 = vsub.s32 0, %v228
      %v230 = vrot.slane %v225, %v229
      %v232 = vadd.f32 %v224, %v230
      %v233 = vmax.f32 %v232, 0.0
      %v234 = vpack.c.bf16 %v233, %v233
      %v235 = vld [vmem:[%s7] sm:$0xf]
      %v236 = vld [vmem:[%s7 + $0x4] sm:$0xf]
      %v237 = vld [vmem:[%s7 + $0x8] sm:$0xf]
      %v238 = vld [vmem:[%s7 + $0xc] sm:$0xf]
      %v243 = vunpack.c.l.b16 %v235
      %v244 = vunpack.c.l.b16 %v236
      %v245 = vunpack.c.l.b16 %v237
      %v246 = vunpack.c.l.b16 %v238
      %v247 = vpack.c.b16 %v244, %v243
      %v248 = vpack.c.b16 %v246, %v245
      %vm251 = vcmask 261120
      %v253 = vsel %vm251, %v234, 0
      %255 = vmatprep.subr.bf16.mxu0 0
      %256 = vmatpush1.bf16.msra.mxu0 %v247
      %257 = vmatprep.subr.bf16.mxu0 0
      %258 = vmatpush1.bf16.msra.mxu0 %v248
      %259 = vmatprep.subr.bf16.mxu0 0
      %260 = vmatpush1.bf16.msra.mxu0 0
      %261 = vmatprep.subr.bf16.mxu0 0
      %262 = vmatpush1.bf16.msra.mxu0 0
      %263 = vmatprep.subr.bf16.mxu0 0
      %264 = vmatpush1.bf16.msra.mxu0 0
      %265 = vmatprep.subr.bf16.mxu0 0
      %266 = vmatpush1.bf16.msra.mxu0 0
      %267 = vmatprep.subr.bf16.mxu0 0
      %268 = vmatpush1.bf16.msra.mxu0 0
      %269 = vmatprep.subr.bf16.mxu0 0
      %270 = vmatpush1.bf16.msra.mxu0 0
      %271 = vmatprep.subr.bf16.mxu0 0
      %272 = vmatpush1.bf16.msra.mxu0 0
      %273 = vmatprep.subr.bf16.mxu0 0
      %274 = vmatpush1.bf16.msra.mxu0 0
      %275 = vmatprep.subr.bf16.mxu0 0
      %276 = vmatpush1.bf16.msra.mxu0 0
      %277 = vmatprep.subr.bf16.mxu0 0
      %278 = vmatpush1.bf16.msra.mxu0 0
      %279 = vmatprep.subr.bf16.mxu0 0
      %280 = vmatpush1.bf16.msra.mxu0 0
      %281 = vmatprep.subr.bf16.mxu0 0
      %282 = vmatpush1.bf16.msra.mxu0 0
      %283 = vmatprep.subr.bf16.mxu0 0
      %284 = vmatpush1.bf16.msra.mxu0 0
      %285 = vmatprep.subr.bf16.mxu0 0
      %286 = vmatpush1.bf16.msra.mxu0 0
      %287 = vmatprep.mubr.bf16.mxu0 0
      %288 = vmatmul.mubr.bf16.gmra.mrb[0].mxu0 %v253
      %v289 = vpop.f32.mrb[0].mxu0
      %v290 = vadd.f32 0.0, %v289
      %v291 = vpop.f32.mrb[0].mxu0
      %v292 = vpop.f32.mrb[0].mxu0
      %v293 = vpop.f32.mrb[0].mxu0
      %294 = vdwg.mxu0
      %v295 = vld [vmem:[%s8] sm:$0x1]
      %v297 = vlaneseq
      %v298 = vshrl.u32 %v297, 7
      %v299 = vsub.s32 0, %v298
      %v300 = vrot.slane %v295, %v299
      %v302 = vmul.f32 %v290, %v300
      %v303 = vld [vmem:[%s9] sm:$0x1]
      %v305 = vlaneseq
      %v306 = vshrl.u32 %v305, 7
      %v307 = vsub.s32 0, %v306
      %v308 = vrot.slane %v303, %v307
      %v310 = vadd.f32 %v302, %v308
      %v311 = vmax.f32 %v310, 0.0
      %v312 = vpack.c.bf16 %v311, %v311
      %vm313 = vcmask 125952
      %314 = vst.msk [vmem:[#allocation2] sm:$0xf] %vm313, %v312
    $region53: #{tpu_custom_call.1} parent=1 // pred_fallthru
      _
    %v315 = vld [vmem:[#allocation2] sm:$0xf]
    %v316 = vld [vmem:[%s10] sm:$0xf]
    %v317 = vld [vmem:[%s10 + $0x4] sm:$0xf]
    %v318 = vld [vmem:[%s11] sm:$0x1]
    %v320 = vlaneseq
    %v321 = vshrl.u32 %v320, 7
    %v322 = vsub.s32 0, %v321
    %v323 = vrot.slane %v318, %v322
    %v327 = vunpack.c.l.b16 %v316
    %v328 = vunpack.c.l.b16 %v317
    %v329 = vpack.c.b16 %v328, %v327
    %vm331 = vcmask 130048
    %v333 = vsel %vm331, %v315, 0
    %335 = vmatprep.subr.bf16.mxu0 0
    %336 = vmatpush1.bf16.msra.mxu0 %v329
    %337 = vmatprep.subr.bf16.mxu0 0
    %338 = vmatpush1.bf16.msra.mxu0 0
    %339 = vmatprep.subr.bf16.mxu0 0
    %340 = vmatpush1.bf16.msra.mxu0 0
    %341 = vmatprep.subr.bf16.mxu0 0
    %342 = vmatpush1.bf16.msra.mxu0 0
    %343 = vmatprep.subr.bf16.mxu0 0
    %344 = vmatpush1.bf16.msra.mxu0 0
    %345 = vmatprep.subr.bf16.mxu0 0
    %346 = vmatpush1.bf16.msra.mxu0 0
    %347 = vmatprep.subr.bf16.mxu0 0
    %348 = vmatpush1.bf16.msra.mxu0 0
    %349 = vmatprep.subr.bf16.mxu0 0
    %350 = vmatpush1.bf16.msra.mxu0 0
    %351 = vmatprep.subr.bf16.mxu0 0
    %352 = vmatpush1.bf16.msra.mxu0 0
    %353 = vmatprep.subr.bf16.mxu0 0
    %354 = vmatpush1.bf16.msra.mxu0 0
    %355 = vmatprep.subr.bf16.mxu0 0
    %356 = vmatpush1.bf16.msra.mxu0 0
    %357 = vmatprep.subr.bf16.mxu0 0
    %358 = vmatpush1.bf16.msra.mxu0 0
    %359 = vmatprep.subr.bf16.mxu0 0
    %360 = vmatpush1.bf16.msra.mxu0 0
    %361 = vmatprep.subr.bf16.mxu0 0
    %362 = vmatpush1.bf16.msra.mxu0 0
    %363 = vmatprep.subr.bf16.mxu0 0
    %364 = vmatpush1.bf16.msra.mxu0 0
    %365 = vmatprep.subr.bf16.mxu0 0
    %366 = vmatpush1.bf16.msra.mxu0 0
    %367 = vmatprep.mubr.bf16.mxu0 0
    %368 = vmatmul.mubr.bf16.gmra.mrb[0].mxu0 %v333
    %v369 = vpop.f32.mrb[0].mxu0
    %v370 = vadd.f32 %v323, %v369
    %v371 = vpop.f32.mrb[0].mxu0
    %v372 = vpop.f32.mrb[0].mxu0
    %v373 = vpop.f32.mrb[0].mxu0
    %374 = vdwg.mxu0
    %v375 = vtanh.pop %v370
    %v376 = vpack.c.bf16 %v375, %v375
    %377 = vst [vmem:[#allocation3] sm:$0xf] %v376
    // Predicated region
    $region54: #{tpu_custom_call.1} parent=1 // pred_check
      _
    $region55: #{tpu_custom_call.1} parent=1 // pred_check_branch
      %379 = sbr.rel (0) target = $region57
    $region56: #{tpu_custom_call.1} parent=1 // pred_region
      %s381 = ssub.s32 64, 64
      %382 = vsyncadd [#allocation4], %s381
      %s384 = sshll.u32 [#allocation3], 4
      %s385 = int_to_ptr.vmem [resolvable:$true] %s384
      %387 = dma.vmem_to_hbm [thread:$0]  %s385, 64, %s12, [#allocation4]
    $region57: #{tpu_custom_call.1} parent=1 // pred_fallthru
      _
    // Predicated region
    $region58: #{tpu_custom_call.1} parent=1 // pred_check
      _
    $region59: #{tpu_custom_call.1} parent=1 // pred_check_branch
      %389 = sbr.rel (0) target = $region61
    $region60: #{tpu_custom_call.1} parent=1 // pred_region
      %390 = dma.done [#allocation4], 64
    $region61: #{tpu_custom_call.1} parent=1 // pred_fallthru
      _
    %391 = vsyncpa [#allocation4], 1

</llo_original>
